<compile_context>
chip_gen: v7x
topology: tpu7x:2x2x1
jax: 0.10.0
libtpu: 0.0.40
codegen_flags: <defaults>
</compile_context>

<pallas_src>
import functools
import math

import jax
import jax.numpy as jnp
from jax.experimental import pallas as pl
from jax.experimental.pallas import tpu as pltpu


_LANE = 128
_TARGET_BLOCK_BYTES = 3 << 20      # ~3 MiB per array per grid step
_MAX_NB = 8                        # cap on the static batch unroll inside the kernel
_VMEM_FLOOR = 24 << 20
_VMEM_CAP = 48 << 20               # headroom under v7x's 64 MiB physical VMEM


def _round_up(v, m):
    return -(-v // m) * m


def _choose_tiling(N, C, HW, itemsize):
    """Pick (nb, tile_hw, hw_pad, n_pad) for the flattened (n_pad*C, hw_pad) layout."""
    sub = max(8, 32 // itemsize)                   # sublane tile: 8 f32 / 16 bf16 / 32 int8
    hw_pad = _round_up(HW, _LANE)                  # lane padding only (feedback #1)
    lane_divs = [d for d in range(_LANE, hw_pad + 1, _LANE) if hw_pad % d == 0]

    # Smallest batch fold that makes the block rows (nb*C) sublane-dense; in the rare case
    # that N is not a multiple of it, the batch dim is padded up (feedback #4).
    need = sub // math.gcd(C, sub)
    n_pad = _round_up(N, need)

    # Fold more batches while the block stays within the per-array budget (overhead amortization).
    nb = need
    for cand in range(need, min(n_pad, max(_MAX_NB, need)) + 1, need):
        if n_pad % cand == 0 and cand * C * _LANE * itemsize <= _TARGET_BLOCK_BYTES:
            nb = cand

    # Largest lane tile that divides hw_pad (no tile-induced padding) and fits the budget.
    tile_hw = _LANE
    for d in lane_divs:
        if nb * C * d * itemsize <= _TARGET_BLOCK_BYTES:
            tile_hw = d

    # Guarantee >=2 grid steps when possible so a v7x megacore can use both TensorCores
    # (feedback #7; a no-op on 1-TC v5e/v6e).
    if (n_pad // nb) * (hw_pad // tile_hw) == 1:
        if hw_pad >= 2 * _LANE:
            tile_hw = [d for d in lane_divs if d < hw_pad][-1]
        elif nb > need:
            smaller = [m for m in range(need, nb, need) if n_pad % m == 0]
            if smaller:
                nb = smaller[-1]

    return nb, tile_hw, hw_pad, n_pad


def _li_kernel(nb, C, use_self_gain, with_xori, mem_ref, x_ref, *rest):
    """out = mem - scale * gain * (max_c(x) - x), channel max per pixel.

    Blocks are dense 2-D (nb*C, tile_hw) slabs; the channel max is taken over static
    (C, tile_hw) row slices (one per folded batch), so no in-kernel reshape is needed.
    """
    if with_xori:
        xori_ref, scale_ref, out_ref = rest
    else:
        scale_ref, out_ref = rest
    scale = scale_ref[0]                                      # runtime scalar from SMEM

    for b in range(nb):                                       # small static unroll (nb <= ~8-16)
        rows = pl.ds(b * C, C)
        x = x_ref[rows, :]                                    # (C, tile_hw)
        xmax = jnp.max(x, axis=0, keepdims=True)              # (1, tile_hw) per-pixel channel max
        if with_xori:                                         # 'max' mode, distinct xori stream
            gain = jnp.max(xori_ref[rows, :], axis=0, keepdims=True)
            coef = scale * gain
        elif use_self_gain:                                   # 'max' mode with xori == x
            coef = scale * xmax
        else:                                                 # 'constant' / 'threshold'
            coef = scale
        out_ref[rows, :] = (mem_ref[rows, :] - coef * (xmax - x)).astype(out_ref.dtype)


def lateral_inhibition(mem, x, inh, mode="constant", xori=None, threshold=1.0):
    """Returns (x, new_mem) mirroring the PyTorch forward + in-place membrane update."""
    assert mem.shape == x.shape and x.ndim == 4
    if mode not in ("constant", "max", "threshold"):
        return x, mem                                         # PyTorch `else: pass`

    N, C, H, W = x.shape
    HW = H * W
    itemsize = jnp.dtype(mem.dtype).itemsize

    nb, tile_hw, hw_pad, n_pad = _choose_tiling(N, C, HW, itemsize)
    padded = (hw_pad != HW) or (n_pad != N)

    def _flatten_pad(a):                                      # (N,C,H,W) -> (n_pad*C, hw_pad)
        a2 = a.reshape(N * C, HW)
        if padded:
            a2 = jnp.pad(a2, ((0, (n_pad - N) * C), (0, hw_pad - HW)))
        return a2

    # `.detach()` on xori.max() is autodiff-only; numerically a no-op in the forward pass.
    use_self_gain = (mode == "max") and (xori is None or xori is x)
    with_xori = (mode == "max") and not use_self_gain
    if with_xori:
        assert xori.shape == x.shape

    mem2 = _flatten_pad(mem)
    x2 = _flatten_pad(x)

    # Runtime scalar in SMEM -> changing inh / threshold never retraces or recompiles.
    inh_f = jnp.asarray(inh, jnp.float32)
    if mode == "threshold":
        scale = (inh_f * jnp.asarray(threshold, jnp.float32)).reshape(1)
    else:
        scale = inh_f.reshape(1)

    blk = pl.BlockSpec((nb * C, tile_hw), lambda n, h: (n, h))
    smem = pl.BlockSpec(memory_space=pltpu.MemorySpace.SMEM)
    grid = (n_pad // nb, hw_pad // tile_hw)
    out_shape = jax.ShapeDtypeStruct((n_pad * C, hw_pad), mem.dtype)

    n_streams = 4 if with_xori else 3                         # mem, x, (xori), out
    block_bytes = nb * C * tile_hw * itemsize                 # rows are sublane-dense by design
    vmem_limit = int(min(_VMEM_CAP, max(_VMEM_FLOOR, n_streams * 2 * block_bytes + (8 << 20))))
    cparams = pltpu.CompilerParams(
        dimension_semantics=("parallel", "parallel"),
        vmem_limit_bytes=vmem_limit,
    )
    elems = n_pad * C * hw_pad
    cost = pl.CostEstimate(
        flops=6 * elems, transcendentals=0, bytes_accessed=n_streams * elems * itemsize
    )
    # Alias mem -> output only when mem2 is a freshly materialized padded temp; otherwise the
    # alias would force XLA to defensively copy a live caller array (feedback #3).
    io_alias = {0: 0} if padded else {}

    kernel = functools.partial(_li_kernel, nb, C, use_self_gain, with_xori)
    if with_xori:
        args = (mem2, x2, _flatten_pad(xori), scale)
        in_specs = [blk, blk, blk, smem]
    else:
        args = (mem2, x2, scale)
        in_specs = [blk, blk, smem]

    new2 = pl.pallas_call(
        kernel,
        out_shape=out_shape,
        grid_spec=pl.GridSpec(grid=grid, in_specs=in_specs, out_specs=blk),
        compiler_params=cparams,
        cost_estimate=cost,
        input_output_aliases=io_alias,
    )(*args)

    new_mem = new2[: N * C, :HW] if padded else new2
    # TODO(synk): in a full SNN step, keep `mem` in the flattened padded layout across timesteps
    # to avoid even this (rare) pad/slice pass.
    return x, new_mem.reshape(N, C, H, W)


def _reference(mem, x, inh, mode, xori=None, threshold=1.0):
    xmax = jnp.max(x, axis=1, keepdims=True)
    if mode == "constant":
        return mem - inh * (xmax - x)
    if mode == "max":
        return mem - inh * jnp.max(xori, axis=1, keepdims=True) * (xmax - x)
    if mode == "threshold":
        return mem - inh * threshold * (xmax - x)
    return mem


if __name__ == "__main__":
    key = jax.random.PRNGKey(0)
    k1, k2, k3 = jax.random.split(key, 3)

    N, C, H, W = 2, 4, 16, 16
    x = jax.random.normal(k1, (N, C, H, W), dtype=jnp.float32)
    mem = jax.random.normal(k2, (N, C, H, W), dtype=jnp.float32)
    xori = jax.random.normal(k3, (N, C, H, W), dtype=jnp.float32)
    inh = 0.1
    threshold = 0.5  # deterministic synthetic node.threshold

    # constant mode
    x_out, nm = lateral_inhibition(mem, x, inh, mode="constant")
    jax.block_until_ready(nm)
    assert jnp.allclose(nm, _reference(mem, x, inh, "constant"), atol=1e-5)
    assert jnp.array_equal(x_out, x)

    # max mode, distinct xori (xori streamed as a third blocked input, max taken in-kernel)
    _, nm_max = lateral_inhibition(mem, x, inh, mode="max", xori=xori)
    jax.block_until_ready(nm_max)
    assert jnp.allclose(nm_max, _reference(mem, x, inh, "max", xori=xori), atol=1e-5)

    # max mode, xori is x (common braincog call site; no third stream)
    _, nm_self = lateral_inhibition(mem, x, inh, mode="max", xori=x)
    jax.block_until_ready(nm_self)
    assert jnp.allclose(nm_self, _reference(mem, x, inh, "max", xori=x), atol=1e-5)

    # threshold mode
    _, nm_thr = lateral_inhibition(mem, x, inh, mode="threshold", threshold=threshold)
    jax.block_until_ready(nm_thr)
    assert jnp.allclose(
        nm_thr, _reference(mem, x, inh, "threshold", threshold=threshold), atol=1e-5
    )

    # ragged path: batch not a multiple of the sublane fold AND HW not lane-aligned
    N2, C2, H2, W2 = 3, 4, 10, 10
    kp1, kp2 = jax.random.split(k3)
    xp = jax.random.normal(kp1, (N2, C2, H2, W2), dtype=jnp.float32)
    mp = jax.random.normal(kp2, (N2, C2, H2, W2), dtype=jnp.float32)
    _, nm_pad = lateral_inhibition(mp, xp, inh, mode="constant")
    jax.block_until_ready(nm_pad)
    assert jnp.allclose(nm_pad, _reference(mp, xp, inh, "constant"), atol=1e-5)

    print("KERNEL_OK")
</pallas_src>

<mosaic_0001>
module attributes {stable_mosaic.version = 11 : i64} {
  func.func @_li_kernel(%arg0: i32, %arg1: i32, %arg2: memref<8x128xf32, #tpu.memory_space<vmem>>, %arg3: memref<8x128xf32, #tpu.memory_space<vmem>>, %arg4: memref<1xf32, #tpu.memory_space<smem>>, %arg5: memref<8x128xf32, #tpu.memory_space<vmem>>) attributes {dimension_semantics = [#tpu.dimension_semantics<parallel>, #tpu.dimension_semantics<parallel>], iteration_bounds = array<i64: 1, 2>, scalar_prefetch = 0 : i64, scratch_operands = 0 : i64, tpu.core_type = #tpu.core_type<tc>, window_params = [{transform_indices = @transform_0, window_bounds = array<i64: 8, 128>}, {transform_indices = @transform_1, window_bounds = array<i64: 8, 128>}, {transform_indices = @transform_2, window_bounds = array<i64: 1>}, {transform_indices = @transform_3, window_bounds = array<i64: 8, 128>}]} {
    %c0 = arith.constant 0 : index
    %0 = memref.load %arg4[%c0] : memref<1xf32, #tpu.memory_space<smem>>
    %c0_0 = arith.constant 0 : index
    %c0_1 = arith.constant 0 : index
    %1 = vector.load %arg3[%c0_0, %c0_1] : memref<8x128xf32, #tpu.memory_space<vmem>>, vector<4x128xf32>
    %cst = arith.constant dense<0xFF800000> : vector<128xf32>
    %2 = vector.multi_reduction <maximumf>, %1, %cst [0] : vector<4x128xf32> to vector<128xf32>
    %3 = vector.shape_cast %2 : vector<128xf32> to vector<1x128xf32>
    %c0_2 = arith.constant 0 : index
    %c0_3 = arith.constant 0 : index
    %4 = vector.load %arg2[%c0_2, %c0_3] : memref<8x128xf32, #tpu.memory_space<vmem>>, vector<4x128xf32>
    %5 = vector.broadcast %3 : vector<1x128xf32> to vector<4x128xf32>
    %6 = arith.subf %5, %1 : vector<4x128xf32>
    %7 = vector.broadcast %0 : f32 to vector<4x128xf32>
    %8 = arith.mulf %7, %6 : vector<4x128xf32>
    %9 = arith.subf %4, %8 : vector<4x128xf32>
    %c0_4 = arith.constant 0 : index
    %c0_5 = arith.constant 0 : index
    %10 = vector.load %arg5[%c0_4, %c0_5] : memref<8x128xf32, #tpu.memory_space<vmem>>, vector<4x128xf32>
    tpu.vector_store %arg5[%c0_4, %c0_5], %9 {strides = array<i32>} : memref<8x128xf32, #tpu.memory_space<vmem>>, vector<4x128xf32>,
    %c4 = arith.constant 4 : index
    %c0_6 = arith.constant 0 : index
    %11 = vector.load %arg3[%c4, %c0_6] : memref<8x128xf32, #tpu.memory_space<vmem>>, vector<4x128xf32>
    %cst_7 = arith.constant dense<0xFF800000> : vector<128xf32>
    %12 = vector.multi_reduction <maximumf>, %11, %cst_7 [0] : vector<4x128xf32> to vector<128xf32>
    %13 = vector.shape_cast %12 : vector<128xf32> to vector<1x128xf32>
    %c4_8 = arith.constant 4 : index
    %c0_9 = arith.constant 0 : index
    %14 = vector.load %arg2[%c4_8, %c0_9] : memref<8x128xf32, #tpu.memory_space<vmem>>, vector<4x128xf32>
    %15 = vector.broadcast %13 : vector<1x128xf32> to vector<4x128xf32>
    %16 = arith.subf %15, %11 : vector<4x128xf32>
    %17 = vector.broadcast %0 : f32 to vector<4x128xf32>
    %18 = arith.mulf %17, %16 : vector<4x128xf32>
    %19 = arith.subf %14, %18 : vector<4x128xf32>
    %c4_10 = arith.constant 4 : index
    %c0_11 = arith.constant 0 : index
    %20 = vector.load %arg5[%c4_10, %c0_11] : memref<8x128xf32, #tpu.memory_space<vmem>>, vector<4x128xf32>
    tpu.vector_store %arg5[%c4_10, %c0_11], %19 {strides = array<i32>} : memref<8x128xf32, #tpu.memory_space<vmem>>, vector<4x128xf32>,
    return
  }
  func.func @transform_0(%arg0: i32, %arg1: i32) -> (i32, i32) {
    %c0_i32 = arith.constant 0 : i32
    return %arg0, %arg1 : i32, i32
  }
  func.func @transform_1(%arg0: i32, %arg1: i32) -> (i32, i32) {
    %c0_i32 = arith.constant 0 : i32
    return %arg0, %arg1 : i32, i32
  }
  func.func @transform_2(%arg0: i32, %arg1: i32) -> i32 {
    %c0_i32 = arith.constant 0 : i32
    %c0_i32_0 = arith.constant 0 : i32
    return %c0_i32 : i32
  }
  func.func @transform_3(%arg0: i32, %arg1: i32) -> (i32, i32) {
    %c0_i32 = arith.constant 0 : i32
    return %arg0, %arg1 : i32, i32
  }
}

</mosaic_0001>

<llo_original>
// kernel: tpu_custom_call.1
$region0: #{tpu_custom_call.1}
  #allocation0 [shape = 'u32[]', space=smem, size = 0x4, offset = 0x4, fixed_abs, tag = 'smem constant byte address 0x4 - core index']
  #allocation1 [shape = 'u32[144,128]{1,0:T(1,128)}', space=vmem, size = 0x12000, scoped, tag = 'internal scratch']
  #allocation2 [shape = 'f32[1]{0:T(128)S(6)}', space=smem, size = 0x200, scoped, tag = 'scoped memory for tpu_custom_call.1']
  %s0 = inlined_call_operand.hbm [shape: f32[8,256], index: 0, kind: input, shape index: {}]
  %s1 = inlined_call_operand.hbm [shape: f32[8,256], index: 1, kind: input, shape index: {}]
  %s2 = inlined_call_operand.<no memory space> [shape: f32[1], index: 2, kind: input, shape index: {}]
  %s3 = inlined_call_operand.hbm [shape: f32[8,256], index: 3, kind: output, shape index: {}]
  %s4 = sld [smem:[#allocation0]]
  $region53: #{tpu_custom_call.1} parent=0
    _
  %s6 = ssub.s32 1, %s4
  %s7 = scalar_select 0, %s6, %s4
  %8 = sst [smem:[#allocation2]] %s2
  $region1: #{tpu_custom_call.1} parent=0
    #allocation3 [shape = 'u8[8192]{0}', space=vmem, size = 0x2000, scoped, tag = 'input window, operand 0']
    #allocation4 [shape = 's32[2]{0}', space=sflag, size = 0x8, scoped, tag = 'scoped memory for tpu_custom_call.1']
    #allocation5 [shape = 's32[2]{0}', space=sflag, size = 0x8, scoped, tag = 'scoped memory for tpu_custom_call.1']
    #allocation6 [shape = 'u8[8192]{0}', space=vmem, size = 0x2000, scoped, tag = 'input window, operand 1']
    #allocation7 [shape = 's32[2]{0}', space=sflag, size = 0x8, scoped, tag = 'scoped memory for tpu_custom_call.1']
    #allocation8 [shape = 'u8[8192]{0}', space=vmem, size = 0x2000, scoped, tag = 'output window, operand 0']
    %9 = vsyncpa [#allocation4], 0
    %s10 = scalar_lea.sflag [#allocation4], 1
    %11 = vsyncpa %s10, 0
    %12 = vsyncpa [#allocation7], 0
    %s13 = scalar_lea.sflag [#allocation7], 1
    %14 = vsyncpa %s13, 0
    %15 = vsyncpa [#allocation5], 0
    %s16 = scalar_lea.sflag [#allocation5], 1
    %17 = vsyncpa %s16, 0
    loop: start=0, step=1, limit=4
    $region2: #{tpu_custom_call.1} parent=1 // loop_pre_header
      _
    $region3: #{tpu_custom_call.1} parent=1 // loop_header
      %s19 = sphi 0, %s23
      %p20 = scmp.ge.s32.totalorder %s19, 4
      %s26 = sphi 0, %s38
      %s27 = sphi 0, %s34
      %s28 = sphi 0, %s26
      %s29 = sphi 0, %s27
      %s30 = sphi 0, %s28
      %s31 = sphi 0, %s29
      %s43 = sphi 0, %s45
      %s46 = sphi 0, %s43
      %s47 = sphi 0, %s46
      %s63 = sphi 0, %s47
      %s71 = sphi 0, %s73
      %s74 = sphi 0, %s71
      %s75 = sphi 0, %s74
      %s91 = sphi 0, %s75
      %s95 = sphi 0, %s95
      %s97 = sphi 0, %s95
      %s98 = sphi 0, %s97
      %s112 = sphi 0, %s98
      %s120 = sphi 0, %s122
      %s123 = sphi 0, %s120
      %s124 = sphi 0, %s123
      %s140 = sphi 0, %s124
    $region4: #{tpu_custom_call.1} parent=1 // loop_header_branch
      %22 = sbr.rel (%p20) target = $region8
    $region5: #{tpu_custom_call.1} parent=1 // loop_body
      %s24 = ssub.s32 %s19, 1
      %s25 = ssub.s32 %s19, 2
      %s32 = sadd.s32 1, %s27
      %p33 = scmp.ge.s32.totalorder %s32, 2
      %s34 = scalar_select %p33, 0, %s32
      %s35 = sadd.s32 1, %s26
      %s36 = scalar_select %p33, %s35, %s26
      %p37 = scmp.ge.s32.totalorder %s36, 1
      %s38 = scalar_select %p37, 0, %s36
      %s39 = ssub.s32 %s26, %s38
      %s40 = ssub.s32 %s27, %s34
      %s41 = sor.u32 %s39, %s40
      %p42 = scmp.eq.s32.totalorder %s41, 0
      %s44 = sadd.s32 %s43, 1
      %s45 = scalar_select %p42, %s43, %s44
      %p48 = pneg %p42
      %p49 = scmp.eq.s32.totalorder %s19, 1
      %p50 = por %p48, %p49
      %p51 = scmp.ne.s32.totalorder %s43, %s46
      %p52 = scmp.eq.s32.totalorder %s19, 0
      %p53 = por %p51, %p52
      %p54 = scmp.ne.s32.totalorder %s43, %s46
      %p55 = scmp.eq.s32.totalorder %s24, 1
      %p56 = por %p54, %p55
      %p57 = scmp.ne.s32.totalorder %s46, %s47
      %p58 = scmp.eq.s32.totalorder %s24, 0
      %p59 = por %p57, %p58
      %p60 = scmp.ne.s32.totalorder %s46, %s47
      %p61 = scmp.eq.s32.totalorder %s25, 1
      %p62 = por %p60, %p61
      %p64 = scmp.ne.s32.totalorder %s47, %s63
      %p65 = scmp.eq.s32.totalorder %s25, 0
      %p66 = por %p64, %p65
      %s67 = ssub.s32 %s26, %s38
      %s68 = ssub.s32 %s27, %s34
      %s69 = sor.u32 %s67, %s68
      %p70 = scmp.eq.s32.totalorder %s69, 0
      %s72 = sadd.s32 %s71, 1
      %s73 = scalar_select %p70, %s71, %s72
      %p76 = pneg %p70
      %p77 = scmp.eq.s32.totalorder %s19, 1
      %p78 = por %p76, %p77
      %p79 = scmp.ne.s32.totalorder %s71, %s74
      %p80 = scmp.eq.s32.totalorder %s19, 0
      %p81 = por %p79, %p80
      %p82 = scmp.ne.s32.totalorder %s71, %s74
      %p83 = scmp.eq.s32.totalorder %s24, 1
      %p84 = por %p82, %p83
      %p85 = scmp.ne.s32.totalorder %s74, %s75
      %p86 = scmp.eq.s32.totalorder %s24, 0
      %p87 = por %p85, %p86
      %p88 = scmp.ne.s32.totalorder %s74, %s75
      %p89 = scmp.eq.s32.totalorder %s25, 1
      %p90 = por %p88, %p89
      %p92 = scmp.ne.s32.totalorder %s75, %s91
      %p93 = scmp.eq.s32.totalorder %s25, 0
      %p94 = por %p92, %p93
      %s96 = sadd.s32 %s95, 1
      %p99 = scmp.eq.s32.totalorder %s19, 1
      %p100 = scmp.ne.s32.totalorder %s95, %s97
      %p101 = scmp.eq.s32.totalorder %s19, 0
      %p102 = por %p100, %p101
      %p103 = scmp.ne.s32.totalorder %s95, %s97
      %p104 = scmp.eq.s32.totalorder %s24, 1
      %p105 = por %p103, %p104
      %p106 = scmp.ne.s32.totalorder %s97, %s98
      %p107 = scmp.eq.s32.totalorder %s24, 0
      %p108 = por %p106, %p107
      %p109 = scmp.ne.s32.totalorder %s97, %s98
      %p110 = scmp.eq.s32.totalorder %s25, 1
      %p111 = por %p109, %p110
      %p113 = scmp.ne.s32.totalorder %s98, %s112
      %p114 = scmp.eq.s32.totalorder %s25, 0
      %p115 = por %p113, %p114
      %s116 = ssub.s32 %s26, %s38
      %s117 = ssub.s32 %s27, %s34
      %s118 = sor.u32 %s116, %s117
      %p119 = scmp.eq.s32.totalorder %s118, 0
      %s121 = sadd.s32 %s120, 1
      %s122 = scalar_select %p119, %s120, %s121
      %p125 = pneg %p119
      %p126 = scmp.eq.s32.totalorder %s19, 1
      %p127 = por %p125, %p126
      %p128 = scmp.ne.s32.totalorder %s120, %s123
      %p129 = scmp.eq.s32.totalorder %s19, 0
      %p130 = por %p128, %p129
      %p131 = scmp.ne.s32.totalorder %s120, %s123
      %p132 = scmp.eq.s32.totalorder %s24, 1
      %p133 = por %p131, %p132
      %p134 = scmp.ne.s32.totalorder %s123, %s124
      %p135 = scmp.eq.s32.totalorder %s24, 0
      %p136 = por %p134, %p135
      %p137 = scmp.ne.s32.totalorder %s123, %s124
      %p138 = scmp.eq.s32.totalorder %s25, 1
      %p139 = por %p137, %p138
      %p141 = scmp.ne.s32.totalorder %s124, %s140
      %p142 = scmp.eq.s32.totalorder %s25, 0
      %p143 = por %p141, %p142
      %p144 = scmp.le.s32.totalorder 1, %s19
      %p145 = scmp.lt.s32.totalorder %s19, 3
      %p146 = pnand %p144, %p145
      %p147 = pneg %p146
      // Predicated region
      $region9: #{tpu_custom_call.1} parent=5 // pred_check
        _
      $region10: #{tpu_custom_call.1} parent=5 // pred_check_branch
        %149 = sbr.rel (%p146) target = $region12
      $region11: #{tpu_custom_call.1} parent=5 // pred_region
        %s150 = ssub.s32 %s19, 1
        // Predicated region
        $region13: #{tpu_custom_call.1} parent=11 // pred_check
          %p151 = pneg %p108
        $region14: #{tpu_custom_call.1} parent=11 // pred_check_branch
          %153 = sbr.rel (%p151) target = $region16
        $region15: #{tpu_custom_call.1} parent=11 // pred_region
          _
        $region16: #{tpu_custom_call.1} parent=11 // pred_fallthru
          _
      $region12: #{tpu_custom_call.1} parent=5 // pred_fallthru
        _
      %p154 = scmp.lt.s32.totalorder %s19, 2
      // Predicated region
      $region17: #{tpu_custom_call.1} parent=5 // pred_check
        %p155 = pneg %p154
      $region18: #{tpu_custom_call.1} parent=5 // pred_check_branch
        %157 = sbr.rel (%p155) target = $region20
      $region19: #{tpu_custom_call.1} parent=5 // pred_region
        // Predicated region
        $region21: #{tpu_custom_call.1} parent=19 // pred_check
          %p158 = pneg %p53
        $region22: #{tpu_custom_call.1} parent=19 // pred_check_branch
          %160 = sbr.rel (%p158) target = $region24
        $region23: #{tpu_custom_call.1} parent=19 // pred_region
          %s161 = sand.u32 %s43, 1
          %s162 = scalar_lea.sflag [#allocation4], %s161
          %s163 = sand.u32 %s43, 1
          %s164 = smul.addr %s163, 8
          %s165 = scalar_lea.vmem [#allocation3], %s164
          %s167 = ssub.s32 128, 128
          %168 = vsyncadd %s162, %s167
          %s169 = smul.addr %s26, 2
          %s170 = sadd.s32 %s27, %s169
          %s171 = smul.addr %s170, 128
          %s172 = scalar_lea.hbm %s0, %s171
          %s174 = sshll.u32 %s165, 4
          %s175 = int_to_ptr.vmem [resolvable:$true] %s174
          %177 = dma.hbm_to_vmem [thread:$0]  %s172, 128, %s175, %s162
        $region24: #{tpu_custom_call.1} parent=19 // pred_fallthru
          _
        // Predicated region
        $region25: #{tpu_custom_call.1} parent=19 // pred_check
          %p178 = pneg %p81
        $region26: #{tpu_custom_call.1} parent=19 // pred_check_branch
          %180 = sbr.rel (%p178) target = $region28
        $region27: #{tpu_custom_call.1} parent=19 // pred_region
          %s181 = sand.u32 %s71, 1
          %s182 = scalar_lea.sflag [#allocation7], %s181
          %s183 = sand.u32 %s71, 1
          %s184 = smul.addr %s183, 8
          %s185 = scalar_lea.vmem [#allocation6], %s184
          %s187 = ssub.s32 128, 128
          %188 = vsyncadd %s182, %s187
          %s189 = smul.addr %s26, 2
          %s190 = sadd.s32 %s27, %s189
          %s191 = smul.addr %s190, 128
          %s192 = scalar_lea.hbm %s1, %s191
          %s194 = sshll.u32 %s185, 4
          %s195 = int_to_ptr.vmem [resolvable:$true] %s194
          %197 = dma.hbm_to_vmem [thread:$0]  %s192, 128, %s195, %s182
        $region28: #{tpu_custom_call.1} parent=19 // pred_fallthru
          _
      $region20: #{tpu_custom_call.1} parent=5 // pred_fallthru
        _
      %p198 = scmp.le.s32.totalorder 1, %s19
      %p199 = scmp.lt.s32.totalorder %s19, 3
      %p200 = pnand %p198, %p199
      %p201 = pneg %p200
      // Predicated region
      $region29: #{tpu_custom_call.1} parent=5 // pred_check
        _
      $region30: #{tpu_custom_call.1} parent=5 // pred_check_branch
        %203 = sbr.rel (%p200) target = $region32
      $region31: #{tpu_custom_call.1} parent=5 // pred_region
        %s204 = ssub.s32 %s19, 1
        %s205 = sand.u32 %s46, 1
        %s206 = scalar_lea.sflag [#allocation4], %s205
        %s207 = sand.u32 %s46, 1
        %s208 = smul.addr %s207, 8
        %s209 = scalar_lea.vmem [#allocation3], %s208
        // Predicated region
        $region33: #{tpu_custom_call.1} parent=31 // pred_check
          %p210 = pneg %p59
        $region34: #{tpu_custom_call.1} parent=31 // pred_check_branch
          %212 = sbr.rel (%p210) target = $region36
        $region35: #{tpu_custom_call.1} parent=31 // pred_region
          %213 = dma.done %s206, 128
        $region36: #{tpu_custom_call.1} parent=31 // pred_fallthru
          _
        %s214 = sand.u32 %s74, 1
        %s215 = scalar_lea.sflag [#allocation7], %s214
        %s216 = sand.u32 %s74, 1
        %s217 = smul.addr %s216, 8
        %s218 = scalar_lea.vmem [#allocation6], %s217
        // Predicated region
        $region37: #{tpu_custom_call.1} parent=31 // pred_check
          %p219 = pneg %p87
        $region38: #{tpu_custom_call.1} parent=31 // pred_check_branch
          %221 = sbr.rel (%p219) target = $region40
        $region39: #{tpu_custom_call.1} parent=31 // pred_region
          %222 = dma.done %s215, 128
        $region40: #{tpu_custom_call.1} parent=31 // pred_fallthru
          _
        %s223 = sand.u32 %s46, 1
        %s224 = scalar_lea.sflag [#allocation4], %s223
        %s225 = sand.u32 %s46, 1
        %s226 = smul.addr %s225, 8
        %s227 = scalar_lea.vmem [#allocation3], %s226
        %p228 = pneg %p59
        %p229 = pneg %p56
        %s230 = sand.u32 %s74, 1
        %s231 = scalar_lea.sflag [#allocation7], %s230
        %s232 = sand.u32 %s74, 1
        %s233 = smul.addr %s232, 8
        %s234 = scalar_lea.vmem [#allocation6], %s233
        %p235 = pneg %p87
        %p236 = pneg %p84
        %p237 = pneg %p108
        %p238 = pneg %p105
        %p239 = pneg %p136
        %p240 = pneg %p133
        %s241 = sand.u32 %s123, 1
        %s242 = scalar_lea.sflag [#allocation5], %s241
        %s243 = sand.u32 %s123, 1
        %s244 = smul.addr %s243, 8
        %s245 = scalar_lea.vmem [#allocation8], %s244
        %s246 = sld [smem:[#allocation2]]
        %v247 = vld [vmem:[%s218] sm:$0xf]
        %vm248 = vcmask 1043456
        %v249 = vsel %vm248, %v247, -inf
        %v250 = vrot.slane %v249, 4
        %v251 = vmax.f32 %v249, %v250
        %v252 = vrot.slane %v251, 2
        %v253 = vmax.f32 %v251, %v252
        %v254 = vrot.slane %v253, 1
        %v255 = vmax.f32 %v253, %v254
        %v256 = vld [vmem:[%s209] sm:$0xf]
        %v257 = vsub.f32 %v255, %v247
        %v258 = vstv %s246
        %v259 = vmul.f32 %v258, %v257
        %v260 = vsub.f32 %v256, %v259
        %261 = vst [vmem:[%s245] sm:$0xf] %v260
        %v262 = vld [vmem:[%s218 + $0x4] sm:$0xf]
        %v263 = vsel %vm248, %v262, -inf
        %v264 = vrot.slane %v263, 4
        %v265 = vmax.f32 %v263, %v264
        %v266 = vrot.slane %v265, 2
        %v267 = vmax.f32 %v265, %v266
        %v268 = vrot.slane %v267, 1
        %v269 = vmax.f32 %v267, %v268
        %v270 = vld [vmem:[%s209 + $0x4] sm:$0xf]
        %v271 = vsub.f32 %v269, %v262
        %v272 = vmul.f32 %v258, %v271
        %v273 = vsub.f32 %v270, %v272
        %274 = vst [vmem:[%s245 + $0x4] sm:$0xf] %v273
        %s275 = sand.u32 %s123, 1
        %s276 = scalar_lea.sflag [#allocation5], %s275
        %s277 = sand.u32 %s123, 1
        %s278 = smul.addr %s277, 8
        %s279 = scalar_lea.vmem [#allocation8], %s278
        // Predicated region
        $region41: #{tpu_custom_call.1} parent=31 // pred_check
          %p280 = pneg %p133
        $region42: #{tpu_custom_call.1} parent=31 // pred_check_branch
          %282 = sbr.rel (%p280) target = $region44
        $region43: #{tpu_custom_call.1} parent=31 // pred_region
          %s284 = ssub.s32 128, 128
          %285 = vsyncadd %s276, %s284
          %s286 = smul.addr %s28, 2
          %s287 = sadd.s32 %s29, %s286
          %s288 = smul.addr %s287, 128
          %s289 = scalar_lea.hbm %s3, %s288
          %s291 = sshll.u32 %s279, 4
          %s292 = int_to_ptr.vmem [resolvable:$true] %s291
          %294 = dma.vmem_to_hbm [thread:$0]  %s292, 128, %s289, %s276
        $region44: #{tpu_custom_call.1} parent=31 // pred_fallthru
          _
      $region32: #{tpu_custom_call.1} parent=5 // pred_fallthru
        _
      %p295 = scmp.le.s32.totalorder 2, %s19
      // Predicated region
      $region45: #{tpu_custom_call.1} parent=5 // pred_check
        %p296 = pneg %p295
      $region46: #{tpu_custom_call.1} parent=5 // pred_check_branch
        %298 = sbr.rel (%p296) target = $region48
      $region47: #{tpu_custom_call.1} parent=5 // pred_region
        %s299 = ssub.s32 %s19, 2
        // Predicated region
        $region49: #{tpu_custom_call.1} parent=47 // pred_check
          %p300 = pneg %p139
        $region50: #{tpu_custom_call.1} parent=47 // pred_check_branch
          %302 = sbr.rel (%p300) target = $region52
        $region51: #{tpu_custom_call.1} parent=47 // pred_region
          %s303 = sand.u32 %s124, 1
          %s304 = scalar_lea.sflag [#allocation5], %s303
          %s305 = sand.u32 %s124, 1
          %s306 = smul.addr %s305, 8
          %s307 = scalar_lea.vmem [#allocation8], %s306
          %308 = dma.done %s304, 128
        $region52: #{tpu_custom_call.1} parent=47 // pred_fallthru
          _
      $region48: #{tpu_custom_call.1} parent=5 // pred_fallthru
        _
    $region6: #{tpu_custom_call.1} parent=1 // loop_footer
      %s23 = sadd.s32 1, %s19
    $region7: #{tpu_custom_call.1} parent=1 // loop_footer_branch
      %18 = sbr.rel target = $region3
    $region8: #{tpu_custom_call.1} parent=1 // loop_exit
      _
    %309 = vsyncpa [#allocation4], 1
    %s310 = scalar_lea.sflag [#allocation4], 1
    %311 = vsyncpa %s310, 1
    %312 = vsyncpa [#allocation7], 1
    %s313 = scalar_lea.sflag [#allocation7], 1
    %314 = vsyncpa %s313, 1
    %315 = vsyncpa [#allocation5], 1
    %s316 = scalar_lea.sflag [#allocation5], 1
    %317 = vsyncpa %s316, 1

</llo_original>
